<compile_context>
chip_gen: v6e
topology: v6e:2x2x1
jax: 0.10.0
libtpu: 0.0.40
codegen_flags: <defaults>
</compile_context>

<pallas_src>
import functools
import math

import jax
import jax.numpy as jnp
from jax import lax
from jax.experimental import pallas as pl
from jax.experimental.pallas import tpu as pltpu

INPUT_DIM = 5
HIDDEN_DIM = 20
OUTPUT_DIM = 50

GPAD = 128   # per-gate lane slot (vreg aligned): gate g lives in lanes [g*GPAD, g*GPAD+H)
HPAD = 128   # padded hidden width carried through the recurrence (padded lanes stay 0)
OPAD = 128   # padded fc output width (lane-dense store); wrapper slices to OUTPUT_DIM


def gru_encoder_kernel(x_ref, wih_ref, whh_ref, bi_ref, bh_ref, wfc_ref, bfc_ref,
                       out_ref, *, steps, batch):
    """Whole forward pass in one kernel invocation.

    x_ref  : (steps*B, D_in)   time-major flattened rows (t*B + b)
    wih_ref: (D_in, 3*GPAD)    fused input->gate weights, gate order (r, z, n)
    whh_ref: (HPAD, 3*GPAD)    fused hidden->gate weights (rows >= H are zero)
    bi_ref : (1, 3*GPAD)       one-shot biases: (b_ir+b_hr | b_iz+b_hz | b_in)
    bh_ref : (1, 3*GPAD)       in-loop hidden bias: (0 | 0 | b_hn)
    wfc_ref: (HPAD, OPAD)      fc weight, zero-padded
    bfc_ref: (1, OPAD)         fc bias, zero-padded
    out_ref: (B, OPAD)         sigmoid(fc(h_{steps-1})) (padded lanes hold sigmoid(0))
    """
    # Hoisted loads: weights/biases read from VMEM once, reused every unrolled step.
    whh = whh_ref[...]
    bh = bh_ref[...]

    # One-shot input projection + folded biases for all needed timesteps.
    ih_all = jnp.dot(x_ref[...], wih_ref[...],
                     preferred_element_type=jnp.float32) + bi_ref[...]   # (steps*B, 3*GPAD)

    h = jnp.zeros((batch, HPAD), jnp.float32)
    for t in range(steps):                       # static trip count -> fully unrolled
        ih = ih_all[t * batch:(t + 1) * batch, :]                 # (B, 3*GPAD), static slice
        hh = jnp.dot(h, whh, preferred_element_type=jnp.float32) + bh
        r = jax.nn.sigmoid(ih[:, :GPAD] + hh[:, :GPAD])
        z = jax.nn.sigmoid(ih[:, GPAD:2 * GPAD] + hh[:, GPAD:2 * GPAD])
        n = jnp.tanh(ih[:, 2 * GPAD:] + r * hh[:, 2 * GPAD:])
        h = (1.0 - z) * n + z * h
        # Padded lanes (>= HIDDEN_DIM): weights/biases are 0 -> r=z=0.5, n=0,
        # h_new = 0.5*h_pad = 0 since h0_pad = 0, so padding stays exactly zero.

    logits = jnp.dot(h, wfc_ref[...], preferred_element_type=jnp.float32) + bfc_ref[...]
    out_ref[...] = jax.nn.sigmoid(logits)


def init_params(key):
    """Deterministic synthetic parameters in PyTorch shapes, gate order (r, z, n)."""
    k = 1.0 / math.sqrt(HIDDEN_DIM)
    ks = jax.random.split(key, 6)
    return dict(
        w_ih=jax.random.uniform(ks[0], (3, HIDDEN_DIM, INPUT_DIM), jnp.float32, -k, k),
        w_hh=jax.random.uniform(ks[1], (3, HIDDEN_DIM, HIDDEN_DIM), jnp.float32, -k, k),
        b_ih=jax.random.uniform(ks[2], (3, HIDDEN_DIM), jnp.float32, -k, k),
        b_hh=jax.random.uniform(ks[3], (3, HIDDEN_DIM), jnp.float32, -k, k),
        w_fc=jax.random.uniform(ks[4], (OUTPUT_DIM, HIDDEN_DIM), jnp.float32, -k, k),
        b_fc=jax.random.uniform(ks[5], (OUTPUT_DIM,), jnp.float32, -k, k),
    )


def prepare_kernel_params(p):
    """Fuse gates into 128-lane slots and pre-fold biases for the kernel layout."""
    wih_f = jnp.zeros((INPUT_DIM, 3 * GPAD), jnp.float32)
    whh_f = jnp.zeros((HPAD, 3 * GPAD), jnp.float32)
    bi_f = jnp.zeros((1, 3 * GPAD), jnp.float32)
    bh_f = jnp.zeros((1, 3 * GPAD), jnp.float32)
    for g in range(3):
        lo = g * GPAD
        wih_f = wih_f.at[:, lo:lo + HIDDEN_DIM].set(p["w_ih"][g].T)
        whh_f = whh_f.at[:HIDDEN_DIM, lo:lo + HIDDEN_DIM].set(p["w_hh"][g].T)
    # r/z: both biases fold into the one-shot input projection.
    bi_f = bi_f.at[0, 0 * GPAD:0 * GPAD + HIDDEN_DIM].set(p["b_ih"][0] + p["b_hh"][0])
    bi_f = bi_f.at[0, 1 * GPAD:1 * GPAD + HIDDEN_DIM].set(p["b_ih"][1] + p["b_hh"][1])
    bi_f = bi_f.at[0, 2 * GPAD:2 * GPAD + HIDDEN_DIM].set(p["b_ih"][2])
    # n-gate hidden bias must stay inside r * (h @ W_hn + b_hn).
    bh_f = bh_f.at[0, 2 * GPAD:2 * GPAD + HIDDEN_DIM].set(p["b_hh"][2])

    wfc_f = jnp.zeros((HPAD, OPAD), jnp.float32).at[:HIDDEN_DIM, :OUTPUT_DIM].set(p["w_fc"].T)
    bfc_f = jnp.zeros((1, OPAD), jnp.float32).at[0, :OUTPUT_DIM].set(p["b_fc"])
    return dict(wih=wih_f, whh=whh_f, bi=bi_f, bh=bh_f, wfc=wfc_f, bfc=bfc_f)


def gru_encoder_forward(feature, kparams):
    """feature: (B, input_dim, T) float32 (PyTorch layout before transpose(1,2))."""
    B, Din, T = feature.shape
    assert Din == INPUT_DIM
    sel_idx = B - 1                 # x.select(1, x.size(0)-1) -> TIME index B-1 (module quirk)
    assert sel_idx < T, "module's select index (batch-1) must be < seq_len"
    steps = sel_idx + 1             # later timesteps cannot affect h at sel_idx

    # Flatten to 2D time-major rows; ship only the timesteps the recurrence needs.
    x_flat = (jnp.transpose(feature, (2, 0, 1))
              .reshape(T * B, INPUT_DIM)[: steps * B]
              .astype(jnp.float32))                                    # (steps*B, D_in)

    operands = (x_flat, kparams["wih"], kparams["whh"], kparams["bi"],
                kparams["bh"], kparams["wfc"], kparams["bfc"])

    def full_spec(shape):
        # single grid point; every operand is one full-array block resident in VMEM
        return pl.BlockSpec(shape, lambda i: (0,) * len(shape))

    kernel = functools.partial(gru_encoder_kernel, steps=steps, batch=B)

    out_pad = pl.pallas_call(
        kernel,
        grid=(1,),
        out_shape=jax.ShapeDtypeStruct((B, OPAD), jnp.float32),
        in_specs=[full_spec(op.shape) for op in operands],
        out_specs=full_spec((B, OPAD)),
        compiler_params=pltpu.CompilerParams(
            dimension_semantics=("arbitrary",)),
    )(*operands)
    return out_pad[:, :OUTPUT_DIM]


def gru_encoder_reference(feature, params):
    """Pure-JAX reference mirroring torch semantics (for verification)."""
    B, Din, T = feature.shape
    x = jnp.transpose(feature, (0, 2, 1)).astype(jnp.float32)   # (B, T, D_in)
    w_ih, w_hh, b_ih, b_hh = params["w_ih"], params["w_hh"], params["b_ih"], params["b_hh"]

    def step(h, x_t):
        r = jax.nn.sigmoid(x_t @ w_ih[0].T + b_ih[0] + h @ w_hh[0].T + b_hh[0])
        z = jax.nn.sigmoid(x_t @ w_ih[1].T + b_ih[1] + h @ w_hh[1].T + b_hh[1])
        n = jnp.tanh(x_t @ w_ih[2].T + b_ih[2] + r * (h @ w_hh[2].T + b_hh[2]))
        h_new = (1.0 - z) * n + z * h
        return h_new, h_new

    h0 = jnp.zeros((B, HIDDEN_DIM), jnp.float32)
    _, hs = lax.scan(step, h0, jnp.transpose(x, (1, 0, 2)))     # hs: (T, B, H)
    h_sel = hs[B - 1]                                           # time index B-1
    return jax.nn.sigmoid(h_sel @ params["w_fc"].T + params["b_fc"])


if __name__ == "__main__":
    key = jax.random.PRNGKey(0)
    k_in, k_par = jax.random.split(key)

    B, T = 2, 8
    feature = jax.random.normal(k_in, (B, INPUT_DIM, T), dtype=jnp.float32)
    params = init_params(k_par)
    kparams = prepare_kernel_params(params)

    out = jax.block_until_ready(gru_encoder_forward(feature, kparams))

    ref = gru_encoder_reference(feature, params)
    assert out.shape == (B, OUTPUT_DIM)
    assert jnp.allclose(out, ref, atol=1e-5, rtol=1e-5), "mismatch vs reference"

    print("KERNEL_OK")
</pallas_src>

<mosaic_0001>
module attributes {stable_mosaic.version = 11 : i64} {
  func.func @gru_encoder_kernel(%arg0: i32, %arg1: memref<4x5xf32, #tpu.memory_space<vmem>>, %arg2: memref<5x384xf32, #tpu.memory_space<vmem>>, %arg3: memref<128x384xf32, #tpu.memory_space<vmem>>, %arg4: memref<1x384xf32, #tpu.memory_space<vmem>>, %arg5: memref<1x384xf32, #tpu.memory_space<vmem>>, %arg6: memref<128x128xf32, #tpu.memory_space<vmem>>, %arg7: memref<1x128xf32, #tpu.memory_space<vmem>>, %arg8: memref<2x128xf32, #tpu.memory_space<vmem>>) attributes {dimension_semantics = [#tpu.dimension_semantics<arbitrary>], iteration_bounds = array<i64: 1>, scalar_prefetch = 0 : i64, scratch_operands = 0 : i64, tpu.core_type = #tpu.core_type<tc>, window_params = [{pipeline_mode = #tpu.pipeline_mode<synchronous>, transform_indices = @transform_0, window_bounds = array<i64: 4, 5>}, {pipeline_mode = #tpu.pipeline_mode<synchronous>, transform_indices = @transform_1, window_bounds = array<i64: 5, 384>}, {pipeline_mode = #tpu.pipeline_mode<synchronous>, transform_indices = @transform_2, window_bounds = array<i64: 128, 384>}, {pipeline_mode = #tpu.pipeline_mode<synchronous>, transform_indices = @transform_3, window_bounds = array<i64: 1, 384>}, {pipeline_mode = #tpu.pipeline_mode<synchronous>, transform_indices = @transform_4, window_bounds = array<i64: 1, 384>}, {pipeline_mode = #tpu.pipeline_mode<synchronous>, transform_indices = @transform_5, window_bounds = array<i64: 128, 128>}, {pipeline_mode = #tpu.pipeline_mode<synchronous>, transform_indices = @transform_6, window_bounds = array<i64: 1, 128>}, {pipeline_mode = #tpu.pipeline_mode<synchronous>, transform_indices = @transform_7, window_bounds = array<i64: 2, 128>}]} {
    %c0 = arith.constant 0 : index
    %c0_0 = arith.constant 0 : index
    %0 = vector.load %arg3[%c0, %c0_0] : memref<128x384xf32, #tpu.memory_space<vmem>>, vector<128x384xf32>
    %c0_1 = arith.constant 0 : index
    %c0_2 = arith.constant 0 : index
    %1 = vector.load %arg5[%c0_1, %c0_2] : memref<1x384xf32, #tpu.memory_space<vmem>>, vector<1x384xf32>
    %c0_3 = arith.constant 0 : index
    %c0_4 = arith.constant 0 : index
    %2 = vector.load %arg1[%c0_3, %c0_4] : memref<4x5xf32, #tpu.memory_space<vmem>>, vector<4x5xf32>
    %c0_5 = arith.constant 0 : index
    %c0_6 = arith.constant 0 : index
    %3 = vector.load %arg2[%c0_5, %c0_6] : memref<5x384xf32, #tpu.memory_space<vmem>>, vector<5x384xf32>
    %cst = arith.constant dense<0.000000e+00> : vector<4x384xf32>
    %4 = tpu.matmul %2, %3, %cst {dimension_numbers = #tpu.dot_dimension_numbers<[1], [0], [0], [1], [0, 0, 1, 1], [], []>} : vector<4x5xf32>, vector<5x384xf32>, vector<4x384xf32> -> vector<4x384xf32>
    %c0_7 = arith.constant 0 : index
    %c0_8 = arith.constant 0 : index
    %5 = vector.load %arg4[%c0_7, %c0_8] : memref<1x384xf32, #tpu.memory_space<vmem>>, vector<1x384xf32>
    %6 = vector.broadcast %5 : vector<1x384xf32> to vector<4x384xf32>
    %7 = arith.addf %4, %6 : vector<4x384xf32>
    %cst_9 = arith.constant 0.000000e+00 : f32
    %8 = vector.broadcast %cst_9 : f32 to vector<2x128xf32>
    %9 = vector.extract_strided_slice %7 {offsets = [0, 0], sizes = [2, 384], strides = [1, 1]} : vector<4x384xf32> to vector<2x384xf32>
    %cst_10 = arith.constant dense<0.000000e+00> : vector<2x384xf32>
    %10 = tpu.matmul %8, %0, %cst_10 {dimension_numbers = #tpu.dot_dimension_numbers<[1], [0], [0], [1], [0, 0, 1, 1], [], []>} : vector<2x128xf32>, vector<128x384xf32>, vector<2x384xf32> -> vector<2x384xf32>
    %11 = vector.broadcast %1 : vector<1x384xf32> to vector<2x384xf32>
    %12 = arith.addf %10, %11 : vector<2x384xf32>
    %13 = vector.extract_strided_slice %9 {offsets = [0, 0], sizes = [2, 128], strides = [1, 1]} : vector<2x384xf32> to vector<2x128xf32>
    %14 = vector.extract_strided_slice %12 {offsets = [0, 0], sizes = [2, 128], strides = [1, 1]} : vector<2x384xf32> to vector<2x128xf32>
    %15 = arith.addf %13, %14 : vector<2x128xf32>
    %16 = arith.negf %15 : vector<2x128xf32>
    %17 = math.exp %16 : vector<2x128xf32>
    %cst_11 = arith.constant 1.000000e+00 : f32
    %18 = vector.broadcast %cst_11 : f32 to vector<2x128xf32>
    %19 = arith.addf %18, %17 : vector<2x128xf32>
    %20 = arith.divf %18, %19 : vector<2x128xf32>
    %21 = vector.extract_strided_slice %9 {offsets = [0, 128], sizes = [2, 128], strides = [1, 1]} : vector<2x384xf32> to vector<2x128xf32>
    %22 = vector.extract_strided_slice %12 {offsets = [0, 128], sizes = [2, 128], strides = [1, 1]} : vector<2x384xf32> to vector<2x128xf32>
    %23 = arith.addf %21, %22 : vector<2x128xf32>
    %24 = arith.negf %23 : vector<2x128xf32>
    %25 = math.exp %24 : vector<2x128xf32>
    %cst_12 = arith.constant 1.000000e+00 : f32
    %26 = vector.broadcast %cst_12 : f32 to vector<2x128xf32>
    %27 = arith.addf %26, %25 : vector<2x128xf32>
    %28 = arith.divf %26, %27 : vector<2x128xf32>
    %29 = vector.extract_strided_slice %9 {offsets = [0, 256], sizes = [2, 128], strides = [1, 1]} : vector<2x384xf32> to vector<2x128xf32>
    %30 = vector.extract_strided_slice %12 {offsets = [0, 256], sizes = [2, 128], strides = [1, 1]} : vector<2x384xf32> to vector<2x128xf32>
    %31 = arith.mulf %20, %30 : vector<2x128xf32>
    %32 = arith.addf %29, %31 : vector<2x128xf32>
    %33 = math.tanh %32 : vector<2x128xf32>
    %cst_13 = arith.constant 1.000000e+00 : f32
    %34 = vector.broadcast %cst_13 : f32 to vector<2x128xf32>
    %35 = arith.subf %34, %28 : vector<2x128xf32>
    %36 = arith.mulf %35, %33 : vector<2x128xf32>
    %37 = arith.mulf %28, %8 : vector<2x128xf32>
    %38 = arith.addf %36, %37 : vector<2x128xf32>
    %39 = vector.extract_strided_slice %7 {offsets = [2, 0], sizes = [2, 384], strides = [1, 1]} : vector<4x384xf32> to vector<2x384xf32>
    %cst_14 = arith.constant dense<0.000000e+00> : vector<2x384xf32>
    %40 = tpu.matmul %38, %0, %cst_14 {dimension_numbers = #tpu.dot_dimension_numbers<[1], [0], [0], [1], [0, 0, 1, 1], [], []>} : vector<2x128xf32>, vector<128x384xf32>, vector<2x384xf32> -> vector<2x384xf32>
    %41 = vector.broadcast %1 : vector<1x384xf32> to vector<2x384xf32>
    %42 = arith.addf %40, %41 : vector<2x384xf32>
    %43 = vector.extract_strided_slice %39 {offsets = [0, 0], sizes = [2, 128], strides = [1, 1]} : vector<2x384xf32> to vector<2x128xf32>
    %44 = vector.extract_strided_slice %42 {offsets = [0, 0], sizes = [2, 128], strides = [1, 1]} : vector<2x384xf32> to vector<2x128xf32>
    %45 = arith.addf %43, %44 : vector<2x128xf32>
    %46 = arith.negf %45 : vector<2x128xf32>
    %47 = math.exp %46 : vector<2x128xf32>
    %cst_15 = arith.constant 1.000000e+00 : f32
    %48 = vector.broadcast %cst_15 : f32 to vector<2x128xf32>
    %49 = arith.addf %48, %47 : vector<2x128xf32>
    %50 = arith.divf %48, %49 : vector<2x128xf32>
    %51 = vector.extract_strided_slice %39 {offsets = [0, 128], sizes = [2, 128], strides = [1, 1]} : vector<2x384xf32> to vector<2x128xf32>
    %52 = vector.extract_strided_slice %42 {offsets = [0, 128], sizes = [2, 128], strides = [1, 1]} : vector<2x384xf32> to vector<2x128xf32>
    %53 = arith.addf %51, %52 : vector<2x128xf32>
    %54 = arith.negf %53 : vector<2x128xf32>
    %55 = math.exp %54 : vector<2x128xf32>
    %cst_16 = arith.constant 1.000000e+00 : f32
    %56 = vector.broadcast %cst_16 : f32 to vector<2x128xf32>
    %57 = arith.addf %56, %55 : vector<2x128xf32>
    %58 = arith.divf %56, %57 : vector<2x128xf32>
    %59 = vector.extract_strided_slice %39 {offsets = [0, 256], sizes = [2, 128], strides = [1, 1]} : vector<2x384xf32> to vector<2x128xf32>
    %60 = vector.extract_strided_slice %42 {offsets = [0, 256], sizes = [2, 128], strides = [1, 1]} : vector<2x384xf32> to vector<2x128xf32>
    %61 = arith.mulf %50, %60 : vector<2x128xf32>
    %62 = arith.addf %59, %61 : vector<2x128xf32>
    %63 = math.tanh %62 : vector<2x128xf32>
    %cst_17 = arith.constant 1.000000e+00 : f32
    %64 = vector.broadcast %cst_17 : f32 to vector<2x128xf32>
    %65 = arith.subf %64, %58 : vector<2x128xf32>
    %66 = arith.mulf %65, %63 : vector<2x128xf32>
    %67 = arith.mulf %58, %38 : vector<2x128xf32>
    %68 = arith.addf %66, %67 : vector<2x128xf32>
    %c0_18 = arith.constant 0 : index
    %c0_19 = arith.constant 0 : index
    %69 = vector.load %arg6[%c0_18, %c0_19] : memref<128x128xf32, #tpu.memory_space<vmem>>, vector<128x128xf32>
    %cst_20 = arith.constant dense<0.000000e+00> : vector<2x128xf32>
    %70 = tpu.matmul %68, %69, %cst_20 {dimension_numbers = #tpu.dot_dimension_numbers<[1], [0], [0], [1], [0, 0, 1, 1], [], []>} : vector<2x128xf32>, vector<128x128xf32>, vector<2x128xf32> -> vector<2x128xf32>
    %c0_21 = arith.constant 0 : index
    %c0_22 = arith.constant 0 : index
    %71 = vector.load %arg7[%c0_21, %c0_22] : memref<1x128xf32, #tpu.memory_space<vmem>>, vector<1x128xf32>
    %72 = vector.broadcast %71 : vector<1x128xf32> to vector<2x128xf32>
    %73 = arith.addf %70, %72 : vector<2x128xf32>
    %74 = arith.negf %73 : vector<2x128xf32>
    %75 = math.exp %74 : vector<2x128xf32>
    %cst_23 = arith.constant 1.000000e+00 : f32
    %76 = vector.broadcast %cst_23 : f32 to vector<2x128xf32>
    %77 = arith.addf %76, %75 : vector<2x128xf32>
    %78 = arith.divf %76, %77 : vector<2x128xf32>
    %c0_24 = arith.constant 0 : index
    %c0_25 = arith.constant 0 : index
    %79 = vector.load %arg8[%c0_24, %c0_25] : memref<2x128xf32, #tpu.memory_space<vmem>>, vector<2x128xf32>
    tpu.vector_store %arg8[%c0_24, %c0_25], %78 {strides = array<i32>} : memref<2x128xf32, #tpu.memory_space<vmem>>, vector<2x128xf32>,
    return
  }
  func.func @transform_0(%arg0: i32) -> (i32, i32) {
    %c0_i32 = arith.constant 0 : i32
    %c0_i32_0 = arith.constant 0 : i32
    %c0_i32_1 = arith.constant 0 : i32
    return %c0_i32, %c0_i32_0 : i32, i32
  }
  func.func @transform_1(%arg0: i32) -> (i32, i32) {
    %c0_i32 = arith.constant 0 : i32
    %c0_i32_0 = arith.constant 0 : i32
    %c0_i32_1 = arith.constant 0 : i32
    return %c0_i32, %c0_i32_0 : i32, i32
  }
  func.func @transform_2(%arg0: i32) -> (i32, i32) {
    %c0_i32 = arith.constant 0 : i32
    %c0_i32_0 = arith.constant 0 : i32
    %c0_i32_1 = arith.constant 0 : i32
    return %c0_i32, %c0_i32_0 : i32, i32
  }
  func.func @transform_3(%arg0: i32) -> (i32, i32) {
    %c0_i32 = arith.constant 0 : i32
    %c0_i32_0 = arith.constant 0 : i32
    %c0_i32_1 = arith.constant 0 : i32
    return %c0_i32, %c0_i32_0 : i32, i32
  }
  func.func @transform_4(%arg0: i32) -> (i32, i32) {
    %c0_i32 = arith.constant 0 : i32
    %c0_i32_0 = arith.constant 0 : i32
    %c0_i32_1 = arith.constant 0 : i32
    return %c0_i32, %c0_i32_0 : i32, i32
  }
  func.func @transform_5(%arg0: i32) -> (i32, i32) {
    %c0_i32 = arith.constant 0 : i32
    %c0_i32_0 = arith.constant 0 : i32
    %c0_i32_1 = arith.constant 0 : i32
    return %c0_i32, %c0_i32_0 : i32, i32
  }
  func.func @transform_6(%arg0: i32) -> (i32, i32) {
    %c0_i32 = arith.constant 0 : i32
    %c0_i32_0 = arith.constant 0 : i32
    %c0_i32_1 = arith.constant 0 : i32
    return %c0_i32, %c0_i32_0 : i32, i32
  }
  func.func @transform_7(%arg0: i32) -> (i32, i32) {
    %c0_i32 = arith.constant 0 : i32
    %c0_i32_0 = arith.constant 0 : i32
    %c0_i32_1 = arith.constant 0 : i32
    return %c0_i32, %c0_i32_0 : i32, i32
  }
}

</mosaic_0001>

<llo_original>
// kernel: tpu_custom_call.1
$region0: #{tpu_custom_call.1}
  #allocation0 [shape = 'u32[]', space=smem, size = 0x4, offset = 0x4, fixed_abs, tag = 'smem constant byte address 0x4 - core index']
  #allocation1 [shape = 'u32[144,128]{1,0:T(1,128)}', space=vmem, size = 0x12000, scoped, tag = 'internal scratch']
  %s0 = inlined_call_operand.hbm [shape: f32[4,5], index: 0, kind: input, shape index: {}]
  %s1 = inlined_call_operand.hbm [shape: f32[5,384], index: 1, kind: input, shape index: {}]
  %s2 = inlined_call_operand.hbm [shape: f32[128,384], index: 2, kind: input, shape index: {}]
  %s3 = inlined_call_operand.vmem [shape: f32[1,384], index: 3, kind: input, shape index: {}]
  %s4 = inlined_call_operand.vmem [shape: f32[1,384], index: 4, kind: input, shape index: {}]
  %s5 = inlined_call_operand.hbm [shape: f32[128,128], index: 5, kind: input, shape index: {}]
  %s6 = inlined_call_operand.vmem [shape: f32[1,128], index: 6, kind: input, shape index: {}]
  %s7 = inlined_call_operand.hbm [shape: f32[2,128], index: 7, kind: output, shape index: {}]
  %s8 = sld [smem:[#allocation0]]
  $region54: #{tpu_custom_call.1} parent=0
    _
  %s10 = ssub.s32 1, %s8
  %s11 = scalar_select 0, %s10, %s8
  $region1: #{tpu_custom_call.1} parent=0
    #allocation2 [shape = 'u8[2048]{0}', space=vmem, size = 0x800, scoped, tag = 'input window, operand 0, single buffered']
    #allocation3 [shape = 's32[1]{0}', space=sflag, size = 0x4, scoped, tag = 'scoped memory for tpu_custom_call.1']
    #allocation4 [shape = 's32[1]{0}', space=sflag, size = 0x4, scoped, tag = 'scoped memory for tpu_custom_call.1']
    #allocation5 [shape = 'u8[12288]{0}', space=vmem, size = 0x3000, scoped, tag = 'input window, operand 1, single buffered']
    #allocation6 [shape = 's32[1]{0}', space=sflag, size = 0x4, scoped, tag = 'scoped memory for tpu_custom_call.1']
    #allocation7 [shape = 'u8[196608]{0}', space=vmem, size = 0x30000, scoped, tag = 'input window, operand 2, single buffered']
    #allocation8 [shape = 'u8[65536]{0}', space=vmem, size = 0x10000, scoped, tag = 'input window, operand 5, single buffered']
    #allocation9 [shape = 's32[1]{0}', space=sflag, size = 0x4, scoped, tag = 'scoped memory for tpu_custom_call.1']
    #allocation10 [shape = 'u8[1024]{0}', space=vmem, size = 0x400, scoped, tag = 'output window, operand 0, single buffered']
    %12 = vsyncpa [#allocation3], 0
    %13 = vsyncpa [#allocation6], 0
    %14 = vsyncpa [#allocation9], 0
    %15 = vsyncpa [#allocation4], 0
    // Predicated region
    $region2: #{tpu_custom_call.1} parent=1 // pred_check
      _
    $region3: #{tpu_custom_call.1} parent=1 // pred_check_branch
      %17 = sbr.rel (0) target = $region5
    $region4: #{tpu_custom_call.1} parent=1 // pred_region
      %s19 = ssub.s32 64, 64
      %20 = vsyncadd [#allocation3], %s19
      %s22 = sshll.u32 [#allocation2], 4
      %s23 = int_to_ptr.vmem [resolvable:$true] %s22
      %25 = dma.hbm_to_vmem [thread:$0]  %s0, 64, %s23, [#allocation3]
    $region5: #{tpu_custom_call.1} parent=1 // pred_fallthru
      _
    // Predicated region
    $region6: #{tpu_custom_call.1} parent=1 // pred_check
      _
    $region7: #{tpu_custom_call.1} parent=1 // pred_check_branch
      %27 = sbr.rel (0) target = $region9
    $region8: #{tpu_custom_call.1} parent=1 // pred_region
      %s29 = ssub.s32 384, 384
      %30 = vsyncadd [#allocation6], %s29
      %s32 = sshll.u32 [#allocation5], 4
      %s33 = int_to_ptr.vmem [resolvable:$true] %s32
      %35 = dma.hbm_to_vmem [thread:$0]  %s1, 384, %s33, [#allocation6]
    $region9: #{tpu_custom_call.1} parent=1 // pred_fallthru
      _
    // Predicated region
    $region10: #{tpu_custom_call.1} parent=1 // pred_check
      _
    $region11: #{tpu_custom_call.1} parent=1 // pred_check_branch
      %37 = sbr.rel (0) target = $region13
    $region12: #{tpu_custom_call.1} parent=1 // pred_region
      %s39 = ssub.s32 6144, 6144
      %40 = vsyncadd [#allocation6], %s39
      %s41 = sshll.u32 [#allocation7], 4
      %s42 = int_to_ptr.vmem [resolvable:$true] %s41
      %47 = dma.hbm_to_vmem [thread:$0]  %s2, 6144, %s42, [#allocation6], 384, 384, 24
    $region13: #{tpu_custom_call.1} parent=1 // pred_fallthru
      _
    // Predicated region
    $region14: #{tpu_custom_call.1} parent=1 // pred_check
      _
    $region15: #{tpu_custom_call.1} parent=1 // pred_check_branch
      %49 = sbr.rel (0) target = $region17
    $region16: #{tpu_custom_call.1} parent=1 // pred_region
      _
    $region17: #{tpu_custom_call.1} parent=1 // pred_fallthru
      _
    // Predicated region
    $region18: #{tpu_custom_call.1} parent=1 // pred_check
      _
    $region19: #{tpu_custom_call.1} parent=1 // pred_check_branch
      %51 = sbr.rel (0) target = $region21
    $region20: #{tpu_custom_call.1} parent=1 // pred_region
      _
    $region21: #{tpu_custom_call.1} parent=1 // pred_fallthru
      _
    // Predicated region
    $region22: #{tpu_custom_call.1} parent=1 // pred_check
      _
    $region23: #{tpu_custom_call.1} parent=1 // pred_check_branch
      %53 = sbr.rel (0) target = $region25
    $region24: #{tpu_custom_call.1} parent=1 // pred_region
      %s55 = ssub.s32 2048, 2048
      %56 = vsyncadd [#allocation9], %s55
      %s57 = sshll.u32 [#allocation8], 4
      %s58 = int_to_ptr.vmem [resolvable:$true] %s57
      %63 = dma.hbm_to_vmem [thread:$0]  %s5, 2048, %s58, [#allocation9], 128, 128, 8
    $region25: #{tpu_custom_call.1} parent=1 // pred_fallthru
      _
    // Predicated region
    $region26: #{tpu_custom_call.1} parent=1 // pred_check
      _
    $region27: #{tpu_custom_call.1} parent=1 // pred_check_branch
      %65 = sbr.rel (0) target = $region29
    $region28: #{tpu_custom_call.1} parent=1 // pred_region
      _
    $region29: #{tpu_custom_call.1} parent=1 // pred_fallthru
      _
    // Predicated region
    $region30: #{tpu_custom_call.1} parent=1 // pred_check
      _
    $region31: #{tpu_custom_call.1} parent=1 // pred_check_branch
      %67 = sbr.rel (0) target = $region33
    $region32: #{tpu_custom_call.1} parent=1 // pred_region
      %68 = dma.done [#allocation3], 64
    $region33: #{tpu_custom_call.1} parent=1 // pred_fallthru
      _
    // Predicated region
    $region34: #{tpu_custom_call.1} parent=1 // pred_check
      _
    $region35: #{tpu_custom_call.1} parent=1 // pred_check_branch
      %70 = sbr.rel (0) target = $region37
    $region36: #{tpu_custom_call.1} parent=1 // pred_region
      %71 = dma.done [#allocation6], 384
    $region37: #{tpu_custom_call.1} parent=1 // pred_fallthru
      _
    // Predicated region
    $region38: #{tpu_custom_call.1} parent=1 // pred_check
      _
    $region39: #{tpu_custom_call.1} parent=1 // pred_check_branch
      %73 = sbr.rel (0) target = $region41
    $region40: #{tpu_custom_call.1} parent=1 // pred_region
      %74 = dma.done [#allocation6], 6144
    $region41: #{tpu_custom_call.1} parent=1 // pred_fallthru
      _
    // Predicated region
    $region42: #{tpu_custom_call.1} parent=1 // pred_check
      _
    $region43: #{tpu_custom_call.1} parent=1 // pred_check_branch
      %76 = sbr.rel (0) target = $region45
    $region44: #{tpu_custom_call.1} parent=1 // pred_region
      %77 = dma.done [#allocation9], 2048
    $region45: #{tpu_custom_call.1} parent=1 // pred_fallthru
      _
    %v78 = vld [vmem:[#allocation7] sm:$0xff]
    %v79 = vld [vmem:[#allocation7 + $0x8] sm:$0xff]
    %v80 = vld [vmem:[#allocation7 + $0x10] sm:$0xff]
    %v81 = vld [vmem:[#allocation7 + $0x18] sm:$0xff]
    %v82 = vld [vmem:[#allocation7 + $0x20] sm:$0xff]
    %v83 = vld [vmem:[#allocation7 + $0x28] sm:$0xff]
    %v84 = vld [vmem:[#allocation7 + $0x30] sm:$0xff]
    %v85 = vld [vmem:[#allocation7 + $0x38] sm:$0xff]
    %v86 = vld [vmem:[#allocation7 + $0x40] sm:$0xff]
    %v87 = vld [vmem:[#allocation7 + $0x48] sm:$0xff]
    %v88 = vld [vmem:[#allocation7 + $0x50] sm:$0xff]
    %v89 = vld [vmem:[#allocation7 + $0x58] sm:$0xff]
    %v90 = vld [vmem:[#allocation7 + $0x60] sm:$0xff]
    %v91 = vld [vmem:[#allocation7 + $0x68] sm:$0xff]
    %v92 = vld [vmem:[#allocation7 + $0x70] sm:$0xff]
    %v93 = vld [vmem:[#allocation7 + $0x78] sm:$0xff]
    %v94 = vld [vmem:[#allocation7 + $0x80] sm:$0xff]
    %v95 = vld [vmem:[#allocation7 + $0x88] sm:$0xff]
    %v96 = vld [vmem:[#allocation7 + $0x90] sm:$0xff]
    %v97 = vld [vmem:[#allocation7 + $0x98] sm:$0xff]
    %v98 = vld [vmem:[#allocation7 + $0xa0] sm:$0xff]
    %v99 = vld [vmem:[#allocation7 + $0xa8] sm:$0xff]
    %v100 = vld [vmem:[#allocation7 + $0xb0] sm:$0xff]
    %v101 = vld [vmem:[#allocation7 + $0xb8] sm:$0xff]
    %v102 = vld [vmem:[#allocation7 + $0xc0] sm:$0xff]
    %v103 = vld [vmem:[#allocation7 + $0xc8] sm:$0xff]
    %v104 = vld [vmem:[#allocation7 + $0xd0] sm:$0xff]
    %v105 = vld [vmem:[#allocation7 + $0xd8] sm:$0xff]
    %v106 = vld [vmem:[#allocation7 + $0xe0] sm:$0xff]
    %v107 = vld [vmem:[#allocation7 + $0xe8] sm:$0xff]
    %v108 = vld [vmem:[#allocation7 + $0xf0] sm:$0xff]
    %v109 = vld [vmem:[#allocation7 + $0xf8] sm:$0xff]
    %v110 = vld [vmem:[#allocation7 + $0x100] sm:$0xff]
    %v111 = vld [vmem:[#allocation7 + $0x108] sm:$0xff]
    %v112 = vld [vmem:[#allocation7 + $0x110] sm:$0xff]
    %v113 = vld [vmem:[#allocation7 + $0x118] sm:$0xff]
    %v114 = vld [vmem:[#allocation7 + $0x120] sm:$0xff]
    %v115 = vld [vmem:[#allocation7 + $0x128] sm:$0xff]
    %v116 = vld [vmem:[#allocation7 + $0x130] sm:$0xff]
    %v117 = vld [vmem:[#allocation7 + $0x138] sm:$0xff]
    %v118 = vld [vmem:[#allocation7 + $0x140] sm:$0xff]
    %v119 = vld [vmem:[#allocation7 + $0x148] sm:$0xff]
    %v120 = vld [vmem:[#allocation7 + $0x150] sm:$0xff]
    %v121 = vld [vmem:[#allocation7 + $0x158] sm:$0xff]
    %v122 = vld [vmem:[#allocation7 + $0x160] sm:$0xff]
    %v123 = vld [vmem:[#allocation7 + $0x168] sm:$0xff]
    %v124 = vld [vmem:[#allocation7 + $0x170] sm:$0xff]
    %v125 = vld [vmem:[#allocation7 + $0x178] sm:$0xff]
    %v126 = vld [vmem:[%s4] sm:$0x7]
    %v127 = vld [vmem:[#allocation2] sm:$0xf]
    %v128 = vld [vmem:[#allocation5] sm:$0x1f]
    %v129 = vld [vmem:[#allocation5 + $0x8] sm:$0x1f]
    %v130 = vld [vmem:[#allocation5 + $0x10] sm:$0x1f]
    %v131 = vld [vmem:[%s3] sm:$0x7]
    %v133 = vlaneseq
    %v134 = vshrl.u32 %v133, 7
    %v135 = vsub.s32 0, %v134
    %v136 = vrot.slane %v131, %v135
    %v137 = vlaneseq
    %v138 = vshrl.u32 %v137, 7
    %v139 = vsub.s32 1, %v138
    %v140 = vrot.slane %v131, %v139
    %v141 = vlaneseq
    %v142 = vshrl.u32 %v141, 7
    %v143 = vsub.s32 2, %v142
    %v144 = vrot.slane %v131, %v143
    %vm148 = vcmask 39936
    %v150 = vsel %vm148, %v127, 0
    %vm152 = vcmask 1044480
    %v154 = vsel %vm152, %v128, 0
    %v157 = vsel %vm152, %v129, 0
    %v160 = vsel %vm152, %v130, 0
    %162 = vmatprep.subr.mxu0 0.0
    %163 = vmatpush1.msra.mxu0 0.0
    %164 = vmatprep.subr.mxu0 0.0
    %165 = vmatpush1.msra.mxu0 0.0
    %166 = vmatprep.subr.mxu0 0.0
    %167 = vmatpush1.msra.mxu0 0.0
    %168 = vmatprep.subr.mxu0 0.0
    %169 = vmatpush1.msra.mxu0 0.0
    %170 = vmatprep.subr.mxu0 0.0
    %171 = vmatpush1.msra.mxu0 0.0
    %172 = vmatprep.subr.mxu0 0.0
    %173 = vmatpush1.msra.mxu0 0.0
    %174 = vmatprep.subr.mxu0 0.0
    %175 = vmatpush1.msra.mxu0 0.0
    %176 = vmatprep.subr.mxu0 0.0
    %177 = vmatpush1.msra.mxu0 0.0
    %178 = vmatprep.subr.mxu0 0.0
    %179 = vmatpush1.msra.mxu0 0.0
    %180 = vmatprep.subr.mxu0 0.0
    %181 = vmatpush1.msra.mxu0 0.0
    %182 = vmatprep.subr.mxu0 0.0
    %183 = vmatpush1.msra.mxu0 0.0
    %184 = vmatprep.subr.mxu0 0.0
    %185 = vmatpush1.msra.mxu0 0.0
    %186 = vmatprep.subr.mxu0 0.0
    %187 = vmatpush1.msra.mxu0 0.0
    %188 = vmatprep.subr.mxu0 0.0
    %189 = vmatpush1.msra.mxu0 0.0
    %190 = vmatprep.subr.mxu0 0.0
    %191 = vmatpush1.msra.mxu0 0.0
    %192 = vmatprep.subr.mxu0 %v157
    %193 = vmatpush1.msra.mxu0 %v154
    %194 = vmatprep.subr.mxu0 0.0
    %195 = vmatpush2.msra.mxu0 0.0
    %196 = vmatprep.subr.mxu0 0.0
    %197 = vmatpush2.msra.mxu0 0.0
    %198 = vmatprep.subr.mxu0 0.0
    %199 = vmatpush2.msra.mxu0 0.0
    %200 = vmatprep.subr.mxu0 0.0
    %201 = vmatpush2.msra.mxu0 0.0
    %202 = vmatprep.subr.mxu0 0.0
    %203 = vmatpush2.msra.mxu0 0.0
    %204 = vmatprep.subr.mxu0 0.0
    %205 = vmatpush2.msra.mxu0 0.0
    %206 = vmatprep.subr.mxu0 0.0
    %207 = vmatpush2.msra.mxu0 0.0
    %208 = vmatprep.subr.mxu0 0.0
    %209 = vmatpush2.msra.mxu0 0.0
    %210 = vmatprep.subr.mxu0 0.0
    %211 = vmatpush2.msra.mxu0 0.0
    %212 = vmatprep.subr.mxu0 0.0
    %213 = vmatpush2.msra.mxu0 0.0
    %214 = vmatprep.subr.mxu0 0.0
    %215 = vmatpush2.msra.mxu0 0.0
    %216 = vmatprep.subr.mxu0 0.0
    %217 = vmatpush2.msra.mxu0 0.0
    %218 = vmatprep.subr.mxu0 0.0
    %219 = vmatpush2.msra.mxu0 0.0
    %220 = vmatprep.subr.mxu0 0.0
    %221 = vmatpush2.msra.mxu0 0.0
    %222 = vmatprep.subr.mxu0 0.0
    %223 = vmatpush2.msra.mxu0 0.0
    %224 = vmatprep.subr.mxu0 0.0
    %225 = vmatpush2.msra.mxu0 0.0
    %226 = vmatprep.mubr.f32.mxu0 0.0
    %227 = vmatmul.mubr.f32.gmra.mxu0 %v150
    %v228 = vpop.f32.mrf.mxu0
    %v229 = vadd.f32 %v136, %v228
    %v230 = vpop.f32.mrf.mxu0
    %v231 = vadd.f32 %v140, %v230
    %232 = vdwg.mxu0
    %233 = vmatprep.subr.mxu0 0.0
    %234 = vmatpush1.msra.mxu0 0.0
    %235 = vmatprep.subr.mxu0 0.0
    %236 = vmatpush1.msra.mxu0 0.0
    %237 = vmatprep.subr.mxu0 0.0
    %238 = vmatpush1.msra.mxu0 0.0
    %239 = vmatprep.subr.mxu0 0.0
    %240 = vmatpush1.msra.mxu0 0.0
    %241 = vmatprep.subr.mxu0 0.0
    %242 = vmatpush1.msra.mxu0 0.0
    %243 = vmatprep.subr.mxu0 0.0
    %244 = vmatpush1.msra.mxu0 0.0
    %245 = vmatprep.subr.mxu0 0.0
    %246 = vmatpush1.msra.mxu0 0.0
    %247 = vmatprep.subr.mxu0 0.0
    %248 = vmatpush1.msra.mxu0 0.0
    %249 = vmatprep.subr.mxu0 0.0
    %250 = vmatpush1.msra.mxu0 0.0
    %251 = vmatprep.subr.mxu0 0.0
    %252 = vmatpush1.msra.mxu0 0.0
    %253 = vmatprep.subr.mxu0 0.0
    %254 = vmatpush1.msra.mxu0 0.0
    %255 = vmatprep.subr.mxu0 0.0
    %256 = vmatpush1.msra.mxu0 0.0
    %257 = vmatprep.subr.mxu0 0.0
    %258 = vmatpush1.msra.mxu0 0.0
    %259 = vmatprep.subr.mxu0 0.0
    %260 = vmatpush1.msra.mxu0 0.0
    %261 = vmatprep.subr.mxu0 0.0
    %262 = vmatpush1.msra.mxu0 0.0
    %263 = vmatprep.subr.mxu0 0.0
    %264 = vmatpush1.msra.mxu0 %v160
    %265 = vmatprep.subr.mxu0 0.0
    %266 = vmatpush2.msra.mxu0 0.0
    %267 = vmatprep.subr.mxu0 0.0
    %268 = vmatpush2.msra.mxu0 0.0
    %269 = vmatprep.subr.mxu0 0.0
    %270 = vmatpush2.msra.mxu0 0.0
    %271 = vmatprep.subr.mxu0 0.0
    %272 = vmatpush2.msra.mxu0 0.0
    %273 = vmatprep.subr.mxu0 0.0
    %274 = vmatpush2.msra.mxu0 0.0
    %275 = vmatprep.subr.mxu0 0.0
    %276 = vmatpush2.msra.mxu0 0.0
    %277 = vmatprep.subr.mxu0 0.0
    %278 = vmatpush2.msra.mxu0 0.0
    %279 = vmatprep.subr.mxu0 0.0
    %280 = vmatpush2.msra.mxu0 0.0
    %281 = vmatprep.subr.mxu0 0.0
    %282 = vmatpush2.msra.mxu0 0.0
    %283 = vmatprep.subr.mxu0 0.0
    %284 = vmatpush2.msra.mxu0 0.0
    %285 = vmatprep.subr.mxu0 0.0
    %286 = vmatpush2.msra.mxu0 0.0
    %287 = vmatprep.subr.mxu0 0.0
    %288 = vmatpush2.msra.mxu0 0.0
    %289 = vmatprep.subr.mxu0 0.0
    %290 = vmatpush2.msra.mxu0 0.0
    %291 = vmatprep.subr.mxu0 0.0
    %292 = vmatpush2.msra.mxu0 0.0
    %293 = vmatprep.subr.mxu0 0.0
    %294 = vmatpush2.msra.mxu0 0.0
    %295 = vmatprep.subr.mxu0 0.0
    %296 = vmatpush2.msra.mxu0 0.0
    %297 = vmatprep.mubr.f32.mxu0 0.0
    %298 = vmatmul.mubr.f32.gmra.mxu0 %v150
    %v299 = vpop.f32.mrf.mxu0
    %v300 = vadd.f32 %v144, %v299
    %v301 = vpop.f32.mrf.mxu0
    %302 = vdwg.mxu0
    %v304 = vlaneseq
    %v305 = vshrl.u32 %v304, 7
    %v306 = vsub.s32 0, %v305
    %v307 = vrot.slane %v126, %v306
    %v308 = vlaneseq
    %v309 = vshrl.u32 %v308, 7
    %v310 = vsub.s32 1, %v309
    %v311 = vrot.slane %v126, %v310
    %v312 = vlaneseq
    %v313 = vshrl.u32 %v312, 7
    %v314 = vsub.s32 2, %v313
    %v315 = vrot.slane %v126, %v314
    %319 = vmatprep.subr.mxu0 %v124
    %320 = vmatpush1.msra.mxu0 %v123
    %321 = vmatprep.subr.mxu0 %v121
    %322 = vmatpush1.msra.mxu0 %v120
    %323 = vmatprep.subr.mxu0 %v118
    %324 = vmatpush1.msra.mxu0 %v117
    %325 = vmatprep.subr.mxu0 %v115
    %326 = vmatpush1.msra.mxu0 %v114
    %327 = vmatprep.subr.mxu0 %v112
    %328 = vmatpush1.msra.mxu0 %v111
    %329 = vmatprep.subr.mxu0 %v109
    %330 = vmatpush1.msra.mxu0 %v108
    %331 = vmatprep.subr.mxu0 %v106
    %332 = vmatpush1.msra.mxu0 %v105
    %333 = vmatprep.subr.mxu0 %v103
    %334 = vmatpush1.msra.mxu0 %v102
    %335 = vmatprep.subr.mxu0 %v100
    %336 = vmatpush1.msra.mxu0 %v99
    %337 = vmatprep.subr.mxu0 %v97
    %338 = vmatpush1.msra.mxu0 %v96
    %339 = vmatprep.subr.mxu0 %v94
    %340 = vmatpush1.msra.mxu0 %v93
    %341 = vmatprep.subr.mxu0 %v91
    %342 = vmatpush1.msra.mxu0 %v90
    %343 = vmatprep.subr.mxu0 %v88
    %344 = vmatpush1.msra.mxu0 %v87
    %345 = vmatprep.subr.mxu0 %v85
    %346 = vmatpush1.msra.mxu0 %v84
    %347 = vmatprep.subr.mxu0 %v82
    %348 = vmatpush1.msra.mxu0 %v81
    %349 = vmatprep.subr.mxu0 %v79
    %350 = vmatpush1.msra.mxu0 %v78
    %351 = vmatprep.subr.mxu0 0.0
    %352 = vmatpush2.msra.mxu0 0.0
    %353 = vmatprep.subr.mxu0 0.0
    %354 = vmatpush2.msra.mxu0 0.0
    %355 = vmatprep.subr.mxu0 0.0
    %356 = vmatpush2.msra.mxu0 0.0
    %357 = vmatprep.subr.mxu0 0.0
    %358 = vmatpush2.msra.mxu0 0.0
    %359 = vmatprep.subr.mxu0 0.0
    %360 = vmatpush2.msra.mxu0 0.0
    %361 = vmatprep.subr.mxu0 0.0
    %362 = vmatpush2.msra.mxu0 0.0
    %363 = vmatprep.subr.mxu0 0.0
    %364 = vmatpush2.msra.mxu0 0.0
    %365 = vmatprep.subr.mxu0 0.0
    %366 = vmatpush2.msra.mxu0 0.0
    %367 = vmatprep.subr.mxu0 0.0
    %368 = vmatpush2.msra.mxu0 0.0
    %369 = vmatprep.subr.mxu0 0.0
    %370 = vmatpush2.msra.mxu0 0.0
    %371 = vmatprep.subr.mxu0 0.0
    %372 = vmatpush2.msra.mxu0 0.0
    %373 = vmatprep.subr.mxu0 0.0
    %374 = vmatpush2.msra.mxu0 0.0
    %375 = vmatprep.subr.mxu0 0.0
    %376 = vmatpush2.msra.mxu0 0.0
    %377 = vmatprep.subr.mxu0 0.0
    %378 = vmatpush2.msra.mxu0 0.0
    %379 = vmatprep.subr.mxu0 0.0
    %380 = vmatpush2.msra.mxu0 0.0
    %381 = vmatprep.subr.mxu0 0.0
    %382 = vmatpush2.msra.mxu0 0.0
    %383 = vmatprep.mubr.f32.mxu0 0.0
    %384 = vmatmul.mubr.f32.gmra.mxu0 0.0
    %v385 = vpop.f32.mrf.mxu0
    %v386 = vadd.f32 %v307, %v385
    %v387 = vpop.f32.mrf.mxu0
    %v388 = vadd.f32 %v311, %v387
    %389 = vdwg.mxu0
    %390 = vmatprep.subr.mxu0 0.0
    %391 = vmatpush1.msra.mxu0 %v125
    %392 = vmatprep.subr.mxu0 0.0
    %393 = vmatpush1.msra.mxu0 %v122
    %394 = vmatprep.subr.mxu0 0.0
    %395 = vmatpush1.msra.mxu0 %v119
    %396 = vmatprep.subr.mxu0 0.0
    %397 = vmatpush1.msra.mxu0 %v116
    %398 = vmatprep.subr.mxu0 0.0
    %399 = vmatpush1.msra.mxu0 %v113
    %400 = vmatprep.subr.mxu0 0.0
    %401 = vmatpush1.msra.mxu0 %v110
    %402 = vmatprep.subr.mxu0 0.0
    %403 = vmatpush1.msra.mxu0 %v107
    %404 = vmatprep.subr.mxu0 0.0
    %405 = vmatpush1.msra.mxu0 %v104
    %406 = vmatprep.subr.mxu0 0.0
    %407 = vmatpush1.msra.mxu0 %v101
    %408 = vmatprep.subr.mxu0 0.0
    %409 = vmatpush1.msra.mxu0 %v98
    %410 = vmatprep.subr.mxu0 0.0
    %411 = vmatpush1.msra.mxu0 %v95
    %412 = vmatprep.subr.mxu0 0.0
    %413 = vmatpush1.msra.mxu0 %v92
    %414 = vmatprep.subr.mxu0 0.0
    %415 = vmatpush1.msra.mxu0 %v89
    %416 = vmatprep.subr.mxu0 0.0
    %417 = vmatpush1.msra.mxu0 %v86
    %418 = vmatprep.subr.mxu0 0.0
    %419 = vmatpush1.msra.mxu0 %v83
    %420 = vmatprep.subr.mxu0 0.0
    %421 = vmatpush1.msra.mxu0 %v80
    %422 = vmatprep.subr.mxu0 0.0
    %423 = vmatpush2.msra.mxu0 0.0
    %424 = vmatprep.subr.mxu0 0.0
    %425 = vmatpush2.msra.mxu0 0.0
    %426 = vmatprep.subr.mxu0 0.0
    %427 = vmatpush2.msra.mxu0 0.0
    %428 = vmatprep.subr.mxu0 0.0
    %429 = vmatpush2.msra.mxu0 0.0
    %430 = vmatprep.subr.mxu0 0.0
    %431 = vmatpush2.msra.mxu0 0.0
    %432 = vmatprep.subr.mxu0 0.0
    %433 = vmatpush2.msra.mxu0 0.0
    %434 = vmatprep.subr.mxu0 0.0
    %435 = vmatpush2.msra.mxu0 0.0
    %436 = vmatprep.subr.mxu0 0.0
    %437 = vmatpush2.msra.mxu0 0.0
    %438 = vmatprep.subr.mxu0 0.0
    %439 = vmatpush2.msra.mxu0 0.0
    %440 = vmatprep.subr.mxu0 0.0
    %441 = vmatpush2.msra.mxu0 0.0
    %442 = vmatprep.subr.mxu0 0.0
    %443 = vmatpush2.msra.mxu0 0.0
    %444 = vmatprep.subr.mxu0 0.0
    %445 = vmatpush2.msra.mxu0 0.0
    %446 = vmatprep.subr.mxu0 0.0
    %447 = vmatpush2.msra.mxu0 0.0
    %448 = vmatprep.subr.mxu0 0.0
    %449 = vmatpush2.msra.mxu0 0.0
    %450 = vmatprep.subr.mxu0 0.0
    %451 = vmatpush2.msra.mxu0 0.0
    %452 = vmatprep.subr.mxu0 0.0
    %453 = vmatpush2.msra.mxu0 0.0
    %454 = vmatprep.mubr.f32.mxu0 0.0
    %455 = vmatmul.mubr.f32.gmra.mxu0 0.0
    %v456 = vpop.f32.mrf.mxu0
    %v457 = vadd.f32 %v315, %v456
    %v458 = vpop.f32.mrf.mxu0
    %459 = vdwg.mxu0
    %v460 = vadd.f32 %v229, %v386
    %v461 = vxor.u32 %v460, 2147483648
    %v462 = vmul.f32 %v461, 1.442695
    %v463 = vpow.pop %v462
    %v464 = vadd.f32 %v463, 1.0
    %v465 = vrcp.pop %v464
    %v466 = vmul.f32 1.0, %v465
    %v467 = vadd.f32 %v231, %v388
    %v468 = vxor.u32 %v467, 2147483648
    %v469 = vmul.f32 %v468, 1.442695
    %v470 = vpow.pop %v469
    %v471 = vadd.f32 %v470, 1.0
    %v472 = vrcp.pop %v471
    %v473 = vmul.f32 1.0, %v472
    %v474 = vmul.f32 %v466, %v457
    %v475 = vadd.f32 %v300, %v474
    %v476 = vtanh.pop %v475
    %v477 = vsub.f32 1.0, %v473
    %v478 = vmul.f32 %v477, %v476
    %v479 = vmul.f32 %v473, 0.0
    %v480 = vadd.f32 %v478, %v479
    %481 = vmatprep.subr.mxu0 %v124
    %482 = vmatpush1.msra.mxu0 %v123
    %483 = vmatprep.subr.mxu0 %v121
    %484 = vmatpush1.msra.mxu0 %v120
    %485 = vmatprep.subr.mxu0 %v118
    %486 = vmatpush1.msra.mxu0 %v117
    %487 = vmatprep.subr.mxu0 %v115
    %488 = vmatpush1.msra.mxu0 %v114
    %489 = vmatprep.subr.mxu0 %v112
    %490 = vmatpush1.msra.mxu0 %v111
    %491 = vmatprep.subr.mxu0 %v109
    %492 = vmatpush1.msra.mxu0 %v108
    %493 = vmatprep.subr.mxu0 %v106
    %494 = vmatpush1.msra.mxu0 %v105
    %495 = vmatprep.subr.mxu0 %v103
    %496 = vmatpush1.msra.mxu0 %v102
    %497 = vmatprep.subr.mxu0 %v100
    %498 = vmatpush1.msra.mxu0 %v99
    %499 = vmatprep.subr.mxu0 %v97
    %500 = vmatpush1.msra.mxu0 %v96
    %501 = vmatprep.subr.mxu0 %v94
    %502 = vmatpush1.msra.mxu0 %v93
    %503 = vmatprep.subr.mxu0 %v91
    %504 = vmatpush1.msra.mxu0 %v90
    %505 = vmatprep.subr.mxu0 %v88
    %506 = vmatpush1.msra.mxu0 %v87
    %507 = vmatprep.subr.mxu0 %v85
    %508 = vmatpush1.msra.mxu0 %v84
    %509 = vmatprep.subr.mxu0 %v82
    %510 = vmatpush1.msra.mxu0 %v81
    %511 = vmatprep.subr.mxu0 %v79
    %512 = vmatpush1.msra.mxu0 %v78
    %513 = vmatprep.subr.mxu0 0.0
    %514 = vmatpush2.msra.mxu0 0.0
    %515 = vmatprep.subr.mxu0 0.0
    %516 = vmatpush2.msra.mxu0 0.0
    %517 = vmatprep.subr.mxu0 0.0
    %518 = vmatpush2.msra.mxu0 0.0
    %519 = vmatprep.subr.mxu0 0.0
    %520 = vmatpush2.msra.mxu0 0.0
    %521 = vmatprep.subr.mxu0 0.0
    %522 = vmatpush2.msra.mxu0 0.0
    %523 = vmatprep.subr.mxu0 0.0
    %524 = vmatpush2.msra.mxu0 0.0
    %525 = vmatprep.subr.mxu0 0.0
    %526 = vmatpush2.msra.mxu0 0.0
    %527 = vmatprep.subr.mxu0 0.0
    %528 = vmatpush2.msra.mxu0 0.0
    %529 = vmatprep.subr.mxu0 0.0
    %530 = vmatpush2.msra.mxu0 0.0
    %531 = vmatprep.subr.mxu0 0.0
    %532 = vmatpush2.msra.mxu0 0.0
    %533 = vmatprep.subr.mxu0 0.0
    %534 = vmatpush2.msra.mxu0 0.0
    %535 = vmatprep.subr.mxu0 0.0
    %536 = vmatpush2.msra.mxu0 0.0
    %537 = vmatprep.subr.mxu0 0.0
    %538 = vmatpush2.msra.mxu0 0.0
    %539 = vmatprep.subr.mxu0 0.0
    %540 = vmatpush2.msra.mxu0 0.0
    %541 = vmatprep.subr.mxu0 0.0
    %542 = vmatpush2.msra.mxu0 0.0
    %543 = vmatprep.subr.mxu0 0.0
    %544 = vmatpush2.msra.mxu0 0.0
    %545 = vmatprep.mubr.f32.mxu0 0.0
    %546 = vmatmul.mubr.f32.gmra.mxu0 %v480
    %v547 = vpop.f32.mrf.mxu0
    %v548 = vadd.f32 %v307, %v547
    %v549 = vpop.f32.mrf.mxu0
    %v550 = vadd.f32 %v311, %v549
    %551 = vdwg.mxu0
    %552 = vmatprep.subr.mxu0 0.0
    %553 = vmatpush1.msra.mxu0 %v125
    %554 = vmatprep.subr.mxu0 0.0
    %555 = vmatpush1.msra.mxu0 %v122
    %556 = vmatprep.subr.mxu0 0.0
    %557 = vmatpush1.msra.mxu0 %v119
    %558 = vmatprep.subr.mxu0 0.0
    %559 = vmatpush1.msra.mxu0 %v116
    %560 = vmatprep.subr.mxu0 0.0
    %561 = vmatpush1.msra.mxu0 %v113
    %562 = vmatprep.subr.mxu0 0.0
    %563 = vmatpush1.msra.mxu0 %v110
    %564 = vmatprep.subr.mxu0 0.0
    %565 = vmatpush1.msra.mxu0 %v107
    %566 = vmatprep.subr.mxu0 0.0
    %567 = vmatpush1.msra.mxu0 %v104
    %568 = vmatprep.subr.mxu0 0.0
    %569 = vmatpush1.msra.mxu0 %v101
    %570 = vmatprep.subr.mxu0 0.0
    %571 = vmatpush1.msra.mxu0 %v98
    %572 = vmatprep.subr.mxu0 0.0
    %573 = vmatpush1.msra.mxu0 %v95
    %574 = vmatprep.subr.mxu0 0.0
    %575 = vmatpush1.msra.mxu0 %v92
    %576 = vmatprep.subr.mxu0 0.0
    %577 = vmatpush1.msra.mxu0 %v89
    %578 = vmatprep.subr.mxu0 0.0
    %579 = vmatpush1.msra.mxu0 %v86
    %580 = vmatprep.subr.mxu0 0.0
    %581 = vmatpush1.msra.mxu0 %v83
    %582 = vmatprep.subr.mxu0 0.0
    %583 = vmatpush1.msra.mxu0 %v80
    %584 = vmatprep.subr.mxu0 0.0
    %585 = vmatpush2.msra.mxu0 0.0
    %586 = vmatprep.subr.mxu0 0.0
    %587 = vmatpush2.msra.mxu0 0.0
    %588 = vmatprep.subr.mxu0 0.0
    %589 = vmatpush2.msra.mxu0 0.0
    %590 = vmatprep.subr.mxu0 0.0
    %591 = vmatpush2.msra.mxu0 0.0
    %592 = vmatprep.subr.mxu0 0.0
    %593 = vmatpush2.msra.mxu0 0.0
    %594 = vmatprep.subr.mxu0 0.0
    %595 = vmatpush2.msra.mxu0 0.0
    %596 = vmatprep.subr.mxu0 0.0
    %597 = vmatpush2.msra.mxu0 0.0
    %598 = vmatprep.subr.mxu0 0.0
    %599 = vmatpush2.msra.mxu0 0.0
    %600 = vmatprep.subr.mxu0 0.0
    %601 = vmatpush2.msra.mxu0 0.0
    %602 = vmatprep.subr.mxu0 0.0
    %603 = vmatpush2.msra.mxu0 0.0
    %604 = vmatprep.subr.mxu0 0.0
    %605 = vmatpush2.msra.mxu0 0.0
    %606 = vmatprep.subr.mxu0 0.0
    %607 = vmatpush2.msra.mxu0 0.0
    %608 = vmatprep.subr.mxu0 0.0
    %609 = vmatpush2.msra.mxu0 0.0
    %610 = vmatprep.subr.mxu0 0.0
    %611 = vmatpush2.msra.mxu0 0.0
    %612 = vmatprep.subr.mxu0 0.0
    %613 = vmatpush2.msra.mxu0 0.0
    %614 = vmatprep.subr.mxu0 0.0
    %615 = vmatpush2.msra.mxu0 0.0
    %616 = vmatprep.mubr.f32.mxu0 0.0
    %617 = vmatmul.mubr.f32.gmra.mxu0 %v480
    %v618 = vpop.f32.mrf.mxu0
    %v619 = vadd.f32 %v315, %v618
    %v620 = vpop.f32.mrf.mxu0
    %621 = vdwg.mxu0
    %v623 = vrot.slane %v548, 6
    %v625 = vadd.f32 %v229, %v623
    %v626 = vxor.u32 %v625, 2147483648
    %v627 = vmul.f32 %v626, 1.442695
    %v628 = vpow.pop %v627
    %v629 = vadd.f32 %v628, 1.0
    %v630 = vrcp.pop %v629
    %v631 = vmul.f32 1.0, %v630
    %v633 = vrot.slane %v550, 6
    %v635 = vadd.f32 %v231, %v633
    %v636 = vxor.u32 %v635, 2147483648
    %v637 = vmul.f32 %v636, 1.442695
    %v638 = vpow.pop %v637
    %v639 = vadd.f32 %v638, 1.0
    %v640 = vrcp.pop %v639
    %v641 = vmul.f32 1.0, %v640
    %v643 = vrot.slane %v619, 6
    %v645 = vmul.f32 %v631, %v643
    %v646 = vadd.f32 %v300, %v645
    %v647 = vtanh.pop %v646
    %v648 = vsub.f32 1.0, %v641
    %v649 = vmul.f32 %v648, %v647
    %v651 = vrot.slane %v480, 6
    %v653 = vmul.f32 %v641, %v651
    %v654 = vadd.f32 %v649, %v653
    %v655 = vld [vmem:[#allocation8] sm:$0xff]
    %v656 = vld [vmem:[#allocation8 + $0x8] sm:$0xff]
    %v657 = vld [vmem:[#allocation8 + $0x10] sm:$0xff]
    %v658 = vld [vmem:[#allocation8 + $0x18] sm:$0xff]
    %v659 = vld [vmem:[#allocation8 + $0x20] sm:$0xff]
    %v660 = vld [vmem:[#allocation8 + $0x28] sm:$0xff]
    %v661 = vld [vmem:[#allocation8 + $0x30] sm:$0xff]
    %v662 = vld [vmem:[#allocation8 + $0x38] sm:$0xff]
    %v663 = vld [vmem:[#allocation8 + $0x40] sm:$0xff]
    %v664 = vld [vmem:[#allocation8 + $0x48] sm:$0xff]
    %v665 = vld [vmem:[#allocation8 + $0x50] sm:$0xff]
    %v666 = vld [vmem:[#allocation8 + $0x58] sm:$0xff]
    %v667 = vld [vmem:[#allocation8 + $0x60] sm:$0xff]
    %v668 = vld [vmem:[#allocation8 + $0x68] sm:$0xff]
    %v669 = vld [vmem:[#allocation8 + $0x70] sm:$0xff]
    %v670 = vld [vmem:[#allocation8 + $0x78] sm:$0xff]
    %v671 = vld [vmem:[%s6] sm:$0x1]
    %v673 = vlaneseq
    %v674 = vshrl.u32 %v673, 7
    %v675 = vsub.s32 0, %v674
    %v676 = vrot.slane %v671, %v675
    %v679 = vrot.slane %v654, 2
    %681 = vmatprep.subr.mxu0 0.0
    %682 = vmatpush1.msra.mxu0 %v670
    %683 = vmatprep.subr.mxu0 0.0
    %684 = vmatpush1.msra.mxu0 %v669
    %685 = vmatprep.subr.mxu0 0.0
    %686 = vmatpush1.msra.mxu0 %v668
    %687 = vmatprep.subr.mxu0 0.0
    %688 = vmatpush1.msra.mxu0 %v667
    %689 = vmatprep.subr.mxu0 0.0
    %690 = vmatpush1.msra.mxu0 %v666
    %691 = vmatprep.subr.mxu0 0.0
    %692 = vmatpush1.msra.mxu0 %v665
    %693 = vmatprep.subr.mxu0 0.0
    %694 = vmatpush1.msra.mxu0 %v664
    %695 = vmatprep.subr.mxu0 0.0
    %696 = vmatpush1.msra.mxu0 %v663
    %697 = vmatprep.subr.mxu0 0.0
    %698 = vmatpush1.msra.mxu0 %v662
    %699 = vmatprep.subr.mxu0 0.0
    %700 = vmatpush1.msra.mxu0 %v661
    %701 = vmatprep.subr.mxu0 0.0
    %702 = vmatpush1.msra.mxu0 %v660
    %703 = vmatprep.subr.mxu0 0.0
    %704 = vmatpush1.msra.mxu0 %v659
    %705 = vmatprep.subr.mxu0 0.0
    %706 = vmatpush1.msra.mxu0 %v658
    %707 = vmatprep.subr.mxu0 0.0
    %708 = vmatpush1.msra.mxu0 %v657
    %709 = vmatprep.subr.mxu0 0.0
    %710 = vmatpush1.msra.mxu0 %v656
    %711 = vmatprep.subr.mxu0 0.0
    %712 = vmatpush1.msra.mxu0 %v655
    %713 = vmatprep.subr.mxu0 0.0
    %714 = vmatpush2.msra.mxu0 0.0
    %715 = vmatprep.subr.mxu0 0.0
    %716 = vmatpush2.msra.mxu0 0.0
    %717 = vmatprep.subr.mxu0 0.0
    %718 = vmatpush2.msra.mxu0 0.0
    %719 = vmatprep.subr.mxu0 0.0
    %720 = vmatpush2.msra.mxu0 0.0
    %721 = vmatprep.subr.mxu0 0.0
    %722 = vmatpush2.msra.mxu0 0.0
    %723 = vmatprep.subr.mxu0 0.0
    %724 = vmatpush2.msra.mxu0 0.0
    %725 = vmatprep.subr.mxu0 0.0
    %726 = vmatpush2.msra.mxu0 0.0
    %727 = vmatprep.subr.mxu0 0.0
    %728 = vmatpush2.msra.mxu0 0.0
    %729 = vmatprep.subr.mxu0 0.0
    %730 = vmatpush2.msra.mxu0 0.0
    %731 = vmatprep.subr.mxu0 0.0
    %732 = vmatpush2.msra.mxu0 0.0
    %733 = vmatprep.subr.mxu0 0.0
    %734 = vmatpush2.msra.mxu0 0.0
    %735 = vmatprep.subr.mxu0 0.0
    %736 = vmatpush2.msra.mxu0 0.0
    %737 = vmatprep.subr.mxu0 0.0
    %738 = vmatpush2.msra.mxu0 0.0
    %739 = vmatprep.subr.mxu0 0.0
    %740 = vmatpush2.msra.mxu0 0.0
    %741 = vmatprep.subr.mxu0 0.0
    %742 = vmatpush2.msra.mxu0 0.0
    %743 = vmatprep.subr.mxu0 0.0
    %744 = vmatpush2.msra.mxu0 0.0
    %745 = vmatprep.mubr.f32.mxu0 0.0
    %746 = vmatmul.mubr.f32.gmra.mxu0 %v679
    %v747 = vpop.f32.mrf.mxu0
    %v748 = vadd.f32 %v676, %v747
    %v749 = vpop.f32.mrf.mxu0
    %750 = vdwg.mxu0
    %v751 = vxor.u32 %v748, 2147483648
    %v752 = vmul.f32 %v751, 1.442695
    %v753 = vpow.pop %v752
    %v754 = vadd.f32 %v753, 1.0
    %v755 = vrcp.pop %v754
    %v756 = vmul.f32 1.0, %v755
    %757 = vst [vmem:[#allocation10] sm:$0x3] %v756
    // Predicated region
    $region46: #{tpu_custom_call.1} parent=1 // pred_check
      _
    $region47: #{tpu_custom_call.1} parent=1 // pred_check_branch
      %759 = sbr.rel (0) target = $region49
    $region48: #{tpu_custom_call.1} parent=1 // pred_region
      %s761 = ssub.s32 32, 32
      %762 = vsyncadd [#allocation4], %s761
      %s764 = sshll.u32 [#allocation10], 4
      %s765 = int_to_ptr.vmem [resolvable:$true] %s764
      %767 = dma.vmem_to_hbm [thread:$0]  %s765, 32, %s7, [#allocation4]
    $region49: #{tpu_custom_call.1} parent=1 // pred_fallthru
      _
    // Predicated region
    $region50: #{tpu_custom_call.1} parent=1 // pred_check
      _
    $region51: #{tpu_custom_call.1} parent=1 // pred_check_branch
      %769 = sbr.rel (0) target = $region53
    $region52: #{tpu_custom_call.1} parent=1 // pred_region
      %770 = dma.done [#allocation4], 32
    $region53: #{tpu_custom_call.1} parent=1 // pred_fallthru
      _
    %771 = vsyncpa [#allocation3], 1
    %772 = vsyncpa [#allocation6], 1
    %773 = vsyncpa [#allocation9], 1
    %774 = vsyncpa [#allocation4], 1

</llo_original>
